<compile_context>
chip_gen: v7x
topology: tpu7x:2x2x1
jax: 0.10.0
libtpu: 0.0.40
codegen_flags: <defaults>
</compile_context>

<pallas_src>
import functools

import jax
import jax.numpy as jnp
from jax.experimental import pallas as pl
from jax.experimental.pallas import tpu as pltpu

LN_EPS = 1e-5


def _imu_tokens_kernel(x_ref, w_ref, gamma_ref, beta_ref, pos_ref, cls_ref,
                       out_ref, *, d_true, num_cls):
    # x_ref:    (1, tt, F)       bf16  token-tile of unfolded IMU patches
    #                                  (tile 0 has num_cls leading zero rows)
    # w_ref:    (F, Dp)          bf16  Linear weight (no bias), resident
    # gamma_ref:(1, Dp)          f32   LayerNorm scale (0 in padded lanes)
    # beta_ref: (1, Dp)          f32   LayerNorm shift (0 in padded lanes)
    # pos_ref:  (tt, Dp)         f32   pos-embed rows for this token tile
    # cls_ref:  (max(num_cls,1), Dp) f32  precomputed cls_token + pos[:num_cls]
    # out_ref:  (1, tt, Dp)      f32   tokens for (batch b, token tile t)
    x = x_ref[0]                                     # (tt, F)  bf16
    w = w_ref[...]                                   # (F, Dp)  bf16

    # Linear (no bias): one bf16 MXU matmul per tile, f32 accumulation.
    t = jnp.dot(x, w, preferred_element_type=jnp.float32)        # (tt, Dp) f32

    # LayerNorm over the *true* embedding dim.  Padded lanes of w are zero, so
    # padded lanes of t are exactly zero and the Dp-wide sums equal D-wide sums.
    inv_d = 1.0 / d_true
    mean = jnp.sum(t, axis=-1, keepdims=True) * inv_d
    mean_sq = jnp.sum(t * t, axis=-1, keepdims=True) * inv_d
    var = jnp.maximum(mean_sq - mean * mean, 0.0)
    ln = (t - mean) * jax.lax.rsqrt(var + LN_EPS)
    ln = ln * gamma_ref[...] + beta_ref[...]         # padded lanes -> 0

    # Add this tile's positional rows; single lane-dense full-block store.
    out_ref[0] = (ln + pos_ref[...]).astype(out_ref.dtype)

    if num_cls > 0:
        # Token-tile 0 owns the batch-invariant cls rows: overwrite the leading
        # num_cls rows (tiny masked store, once per batch).
        @pl.when(pl.program_id(1) == 0)
        def _():
            out_ref[0, 0:num_cls, :] = cls_ref[...].astype(out_ref.dtype)


def imu_preprocessor_forward(imu, params, kernel_size, *, token_tile=None):
    """imu: (B, C, T) float32. Returns dict like the PyTorch module."""
    B, C, T = imu.shape
    K = kernel_size
    N = T // K
    F = C * K
    D = params["w"].shape[1]
    num_cls = params["cls_token"].shape[1]
    total_tok = N + num_cls

    # --- layout glue: unfold / permute / reshape (pure layout, fused by XLA) -
    x = imu.reshape(B, C, N, K).transpose(0, 2, 1, 3).reshape(B, N, F)
    if num_cls > 0:
        # Prepend num_cls zero rows so data for output token j lives at row j;
        # this lets the kernel emit the full (B, N+num_cls, D) tokens tensor
        # directly (no wrapper concat => no extra full-tensor HBM round trip).
        x = jnp.pad(x, ((0, 0), (num_cls, 0), (0, 0)))

    # --- lane padding: embedding dim rounded up to a multiple of 128 ---------
    Dp = max(128, pl.cdiv(D, 128) * 128)
    pad = Dp - D
    w = params["w"]                                   # (F, D)
    gamma = params["ln_gamma"].reshape(1, D)
    beta = params["ln_beta"].reshape(1, D)
    pos = params["pos_embed"][0]                      # (total_tok, D)
    if num_cls > 0:
        cls_rows = params["cls_token"][0] + pos[:num_cls]          # (num_cls, D)
    else:
        cls_rows = jnp.zeros((1, D), jnp.float32)                  # unused dummy
    if pad:
        zcol = lambda a: jnp.pad(a, ((0, 0), (0, pad)))
        w, gamma, beta, pos, cls_rows = map(zcol, (w, gamma, beta, pos, cls_rows))

    # bf16 MXU inputs; LN math stays f32 inside the kernel (v5e-safe).
    x_bf = x.astype(jnp.bfloat16)
    w_bf = w.astype(jnp.bfloat16)

    # --- token tiling: multiple-of-8 row tiles, resident weights -------------
    if token_tile is None:
        token_tile = total_tok if total_tok <= 512 else 512
    tt = min(token_tile, total_tok)
    if tt != total_tok:
        tt = max(8, (tt // 8) * 8)            # sublane-aligned tiles
    n_tiles = pl.cdiv(total_tok, tt)

    kernel = functools.partial(_imu_tokens_kernel, d_true=float(D),
                               num_cls=num_cls)

    tokens_p = pl.pallas_call(
        kernel,
        out_shape=jax.ShapeDtypeStruct((B, total_tok, Dp), jnp.float32),
        grid=(B, n_tiles),
        in_specs=[
            pl.BlockSpec((1, tt, F), lambda b, t: (b, t, 0)),            # x
            pl.BlockSpec((F, Dp), lambda b, t: (0, 0)),                  # w (resident)
            pl.BlockSpec((1, Dp), lambda b, t: (0, 0)),                  # gamma
            pl.BlockSpec((1, Dp), lambda b, t: (0, 0)),                  # beta
            pl.BlockSpec((tt, Dp), lambda b, t: (t, 0)),                 # pos tile
            pl.BlockSpec((max(num_cls, 1), Dp), lambda b, t: (0, 0)),    # cls rows
        ],
        out_specs=pl.BlockSpec((1, tt, Dp), lambda b, t: (b, t, 0)),
        compiler_params=pltpu.CompilerParams(
            dimension_semantics=("parallel", "parallel")),
    )(x_bf, w_bf, gamma, beta, pos, cls_rows)

    tokens = tokens_p[..., :D] if pad else tokens_p
    return {"trunk": {"tokens": tokens}, "head": {}}


def _reference_forward(imu, params, kernel_size):
    """Pure-JAX f32 reference matching the PyTorch semantics."""
    B, C, T = imu.shape
    K = kernel_size
    N = T // K
    F = C * K
    x = imu.reshape(B, C, N, K).transpose(0, 2, 1, 3).reshape(B, N, F)
    t = x @ params["w"]
    mean = t.mean(-1, keepdims=True)
    var = ((t - mean) ** 2).mean(-1, keepdims=True)
    ln = (t - mean) / jnp.sqrt(var + LN_EPS)
    ln = ln * params["ln_gamma"] + params["ln_beta"]
    num_cls = params["cls_token"].shape[1]
    cls = jnp.broadcast_to(params["cls_token"], (B, num_cls, ln.shape[-1]))
    tok = jnp.concatenate([cls, ln], axis=1) + params["pos_embed"]
    return tok


def init_params(key, channels, seq_len, kernel_size, embed_dim,
                num_cls_tokens=1):
    """Deterministic synthetic parameters (shapes match the nn.Module)."""
    N = seq_len // kernel_size
    F = channels * kernel_size
    k_pos, k_cls, k_w = jax.random.split(key, 3)
    pos_embed = 0.01 * jax.random.normal(
        k_pos, (1, N + num_cls_tokens, embed_dim), jnp.float32)
    cls_token = (embed_dim ** -0.5) * jax.random.normal(
        k_cls, (1, num_cls_tokens, embed_dim), jnp.float32)
    # Linear(in=F, out=D, bias=False); stored transposed as (F, D).
    w = jax.random.normal(k_w, (F, embed_dim), jnp.float32) / jnp.sqrt(F)
    return {
        "pos_embed": pos_embed,
        "cls_token": cls_token,
        "w": w,
        "ln_gamma": jnp.ones((embed_dim,), jnp.float32),
        "ln_beta": jnp.zeros((embed_dim,), jnp.float32),
    }


if __name__ == "__main__":
    def run_case(B, C, T, K, D, token_tile=None):
        key = jax.random.PRNGKey(0)
        k_imu, k_par = jax.random.split(key)
        imu = jax.random.normal(k_imu, (B, C, T), jnp.float32)
        params = init_params(k_par, C, T, K, D)
        out = imu_preprocessor_forward(imu, params, K, token_tile=token_tile)
        tokens = jax.block_until_ready(out["trunk"]["tokens"])
        ref = _reference_forward(imu, params, K)
        assert tokens.shape == (B, T // K + 1, D), tokens.shape
        # bf16 MXU inputs => relaxed tolerance vs. the f32 reference.
        assert jnp.allclose(tokens, ref, atol=6e-2, rtol=6e-2), \
            float(jnp.max(jnp.abs(tokens - ref)))

    # Small demo shapes consistent with the module: img_size=(6, 64), K=8, D=32
    # (D padded to 128 lanes internally, single token tile).
    run_case(B=2, C=6, T=64, K=8, D=32)
    # Larger config exercising the (batch, token-tile) grid: 256 tokens, 2 tiles.
    run_case(B=2, C=6, T=2040, K=8, D=256, token_tile=128)

    print("KERNEL_OK")
</pallas_src>

<mosaic_0001>
module attributes {stable_mosaic.version = 11 : i64} {
  func.func @_imu_tokens_kernel(%arg0: i32, %arg1: i32, %arg2: memref<1x9x48xbf16, #tpu.memory_space<vmem>>, %arg3: memref<48x128xbf16, #tpu.memory_space<vmem>>, %arg4: memref<1x128xf32, #tpu.memory_space<vmem>>, %arg5: memref<1x128xf32, #tpu.memory_space<vmem>>, %arg6: memref<9x128xf32, #tpu.memory_space<vmem>>, %arg7: memref<1x128xf32, #tpu.memory_space<vmem>>, %arg8: memref<1x9x128xf32, #tpu.memory_space<vmem>>) attributes {dimension_semantics = [#tpu.dimension_semantics<parallel>, #tpu.dimension_semantics<parallel>], iteration_bounds = array<i64: 2, 1>, scalar_prefetch = 0 : i64, scratch_operands = 0 : i64, tpu.core_type = #tpu.core_type<tc>, window_params = [{transform_indices = @transform_0, window_bounds = array<i64: 1, 9, 48>}, {pipeline_mode = #tpu.pipeline_mode<synchronous>, transform_indices = @transform_1, window_bounds = array<i64: 48, 128>}, {pipeline_mode = #tpu.pipeline_mode<synchronous>, transform_indices = @transform_2, window_bounds = array<i64: 1, 128>}, {pipeline_mode = #tpu.pipeline_mode<synchronous>, transform_indices = @transform_3, window_bounds = array<i64: 1, 128>}, {transform_indices = @transform_4, window_bounds = array<i64: 9, 128>}, {pipeline_mode = #tpu.pipeline_mode<synchronous>, transform_indices = @transform_5, window_bounds = array<i64: 1, 128>}, {transform_indices = @transform_6, window_bounds = array<i64: 1, 9, 128>}]} {
    %c0 = arith.constant 0 : index
    %c0_0 = arith.constant 0 : index
    %c0_1 = arith.constant 0 : index
    %0 = vector.load %arg2[%c0, %c0_0, %c0_1] : memref<1x9x48xbf16, #tpu.memory_space<vmem>>, vector<1x9x48xbf16>
    %1 = vector.shape_cast %0 : vector<1x9x48xbf16> to vector<9x48xbf16>
    %c0_2 = arith.constant 0 : index
    %c0_3 = arith.constant 0 : index
    %2 = vector.load %arg3[%c0_2, %c0_3] : memref<48x128xbf16, #tpu.memory_space<vmem>>, vector<48x128xbf16>
    %cst = arith.constant dense<0.000000e+00> : vector<9x128xf32>
    %3 = tpu.matmul %1, %2, %cst {dimension_numbers = #tpu.dot_dimension_numbers<[1], [0], [0], [1], [0, 0, 1, 1], [], []>} : vector<9x48xbf16>, vector<48x128xbf16>, vector<9x128xf32> -> vector<9x128xf32>
    %cst_4 = arith.constant dense<0.000000e+00> : vector<9xf32>
    %4 = vector.multi_reduction <add>, %3, %cst_4 [1] : vector<9x128xf32> to vector<9xf32>
    %5 = vector.shape_cast %4 : vector<9xf32> to vector<9x1xf32>
    %cst_5 = arith.constant 3.125000e-02 : f32
    %6 = vector.broadcast %cst_5 : f32 to vector<9x1xf32>
    %7 = arith.mulf %5, %6 : vector<9x1xf32>
    %8 = arith.mulf %3, %3 : vector<9x128xf32>
    %cst_6 = arith.constant dense<0.000000e+00> : vector<9xf32>
    %9 = vector.multi_reduction <add>, %8, %cst_6 [1] : vector<9x128xf32> to vector<9xf32>
    %10 = vector.shape_cast %9 : vector<9xf32> to vector<9x1xf32>
    %cst_7 = arith.constant 3.125000e-02 : f32
    %11 = vector.broadcast %cst_7 : f32 to vector<9x1xf32>
    %12 = arith.mulf %10, %11 : vector<9x1xf32>
    %13 = arith.mulf %7, %7 : vector<9x1xf32>
    %14 = arith.subf %12, %13 : vector<9x1xf32>
    %cst_8 = arith.constant 0.000000e+00 : f32
    %15 = vector.broadcast %cst_8 : f32 to vector<9x1xf32>
    %16 = arith.maximumf %14, %15 : vector<9x1xf32>
    %17 = vector.broadcast %7 : vector<9x1xf32> to vector<9x128xf32>
    %18 = arith.subf %3, %17 : vector<9x128xf32>
    %cst_9 = arith.constant 9.99999974E-6 : f32
    %19 = vector.broadcast %cst_9 : f32 to vector<9x1xf32>
    %20 = arith.addf %16, %19 : vector<9x1xf32>
    %21 = math.rsqrt %20 : vector<9x1xf32>
    %22 = vector.broadcast %21 : vector<9x1xf32> to vector<9x128xf32>
    %23 = arith.mulf %18, %22 : vector<9x128xf32>
    %c0_10 = arith.constant 0 : index
    %c0_11 = arith.constant 0 : index
    %24 = vector.load %arg4[%c0_10, %c0_11] : memref<1x128xf32, #tpu.memory_space<vmem>>, vector<1x128xf32>
    %25 = vector.broadcast %24 : vector<1x128xf32> to vector<9x128xf32>
    %26 = arith.mulf %23, %25 : vector<9x128xf32>
    %c0_12 = arith.constant 0 : index
    %c0_13 = arith.constant 0 : index
    %27 = vector.load %arg5[%c0_12, %c0_13] : memref<1x128xf32, #tpu.memory_space<vmem>>, vector<1x128xf32>
    %28 = vector.broadcast %27 : vector<1x128xf32> to vector<9x128xf32>
    %29 = arith.addf %26, %28 : vector<9x128xf32>
    %c0_14 = arith.constant 0 : index
    %c0_15 = arith.constant 0 : index
    %30 = vector.load %arg6[%c0_14, %c0_15] : memref<9x128xf32, #tpu.memory_space<vmem>>, vector<9x128xf32>
    %31 = arith.addf %29, %30 : vector<9x128xf32>
    %c0_16 = arith.constant 0 : index
    %c0_17 = arith.constant 0 : index
    %c0_18 = arith.constant 0 : index
    %32 = vector.load %arg8[%c0_16, %c0_17, %c0_18] : memref<1x9x128xf32, #tpu.memory_space<vmem>>, vector<1x9x128xf32>
    %33 = vector.shape_cast %32 : vector<1x9x128xf32> to vector<9x128xf32>
    %34 = vector.shape_cast %31 : vector<9x128xf32> to vector<1x9x128xf32>
    tpu.vector_store %arg8[%c0_16, %c0_17, %c0_18], %34 {strides = array<i32>} : memref<1x9x128xf32, #tpu.memory_space<vmem>>, vector<1x9x128xf32>,
    %c0_i32 = arith.constant 0 : i32
    %35 = arith.cmpi eq, %arg1, %c0_i32 : i32
    %36 = arith.extui %35 : i1 to i32
    %c0_i32_19 = arith.constant 0 : i32
    %37 = arith.cmpi ne, %36, %c0_i32_19 : i32
    scf.if %37 {
      %c0_20 = arith.constant 0 : index
      %c0_21 = arith.constant 0 : index
      %38 = vector.load %arg7[%c0_20, %c0_21] : memref<1x128xf32, #tpu.memory_space<vmem>>, vector<1x128xf32>
      %c0_22 = arith.constant 0 : index
      %c0_23 = arith.constant 0 : index
      %c0_24 = arith.constant 0 : index
      %39 = vector.load %arg8[%c0_22, %c0_23, %c0_24] : memref<1x9x128xf32, #tpu.memory_space<vmem>>, vector<1x1x128xf32>
      %40 = vector.shape_cast %39 : vector<1x1x128xf32> to vector<1x128xf32>
      %41 = vector.shape_cast %38 : vector<1x128xf32> to vector<1x1x128xf32>
      tpu.vector_store %arg8[%c0_22, %c0_23, %c0_24], %41 {strides = array<i32>} : memref<1x9x128xf32, #tpu.memory_space<vmem>>, vector<1x1x128xf32>,
    } else {
    }
    return
  }
  func.func @transform_0(%arg0: i32, %arg1: i32) -> (i32, i32, i32) {
    %c0_i32 = arith.constant 0 : i32
    %c0_i32_0 = arith.constant 0 : i32
    return %arg0, %arg1, %c0_i32 : i32, i32, i32
  }
  func.func @transform_1(%arg0: i32, %arg1: i32) -> (i32, i32) {
    %c0_i32 = arith.constant 0 : i32
    %c0_i32_0 = arith.constant 0 : i32
    %c0_i32_1 = arith.constant 0 : i32
    return %c0_i32, %c0_i32_0 : i32, i32
  }
  func.func @transform_2(%arg0: i32, %arg1: i32) -> (i32, i32) {
    %c0_i32 = arith.constant 0 : i32
    %c0_i32_0 = arith.constant 0 : i32
    %c0_i32_1 = arith.constant 0 : i32
    return %c0_i32, %c0_i32_0 : i32, i32
  }
  func.func @transform_3(%arg0: i32, %arg1: i32) -> (i32, i32) {
    %c0_i32 = arith.constant 0 : i32
    %c0_i32_0 = arith.constant 0 : i32
    %c0_i32_1 = arith.constant 0 : i32
    return %c0_i32, %c0_i32_0 : i32, i32
  }
  func.func @transform_4(%arg0: i32, %arg1: i32) -> (i32, i32) {
    %c0_i32 = arith.constant 0 : i32
    %c0_i32_0 = arith.constant 0 : i32
    return %arg1, %c0_i32 : i32, i32
  }
  func.func @transform_5(%arg0: i32, %arg1: i32) -> (i32, i32) {
    %c0_i32 = arith.constant 0 : i32
    %c0_i32_0 = arith.constant 0 : i32
    %c0_i32_1 = arith.constant 0 : i32
    return %c0_i32, %c0_i32_0 : i32, i32
  }
  func.func @transform_6(%arg0: i32, %arg1: i32) -> (i32, i32, i32) {
    %c0_i32 = arith.constant 0 : i32
    %c0_i32_0 = arith.constant 0 : i32
    return %arg0, %arg1, %c0_i32 : i32, i32, i32
  }
}

</mosaic_0001>

<llo_original>
// kernel: tpu_custom_call.1
$region0: #{tpu_custom_call.1}
  #allocation0 [shape = 'u32[]', space=smem, size = 0x4, offset = 0x4, fixed_abs, tag = 'smem constant byte address 0x4 - core index']
  #allocation1 [shape = 'u32[144,128]{1,0:T(1,128)}', space=vmem, size = 0x12000, scoped, tag = 'internal scratch']
  %s0 = inlined_call_operand.vmem [shape: bf16[2,9,48], index: 0, kind: input, shape index: {}]
  %s1 = inlined_call_operand.vmem [shape: bf16[48,128], index: 1, kind: input, shape index: {}]
  %s2 = inlined_call_operand.hbm [shape: f32[1,128], index: 2, kind: input, shape index: {}]
  %s3 = inlined_call_operand.hbm [shape: f32[1,128], index: 3, kind: input, shape index: {}]
  %s4 = inlined_call_operand.vmem [shape: f32[9,128], index: 4, kind: input, shape index: {}]
  %s5 = inlined_call_operand.vmem [shape: f32[1,128], index: 5, kind: input, shape index: {}]
  %s6 = inlined_call_operand.vmem [shape: f32[2,9,128], index: 6, kind: output, shape index: {}]
  %s7 = sld [smem:[#allocation0]]
  $region69: #{tpu_custom_call.1} parent=0
    _
  %s9 = ssub.s32 1, %s7
  %s10 = scalar_select 0, %s9, %s7
  $region1: #{tpu_custom_call.1} parent=0
    #allocation2 [shape = 'u8[512]{0}', space=vmem, size = 0x400, scoped, tag = 'input window, operand 2, single buffered']
    #allocation3 [shape = 's32[2]{0}', space=sflag, size = 0x8, scoped, tag = 'scoped memory for tpu_custom_call.1']
    #allocation4 [shape = 'u8[512]{0}', space=vmem, size = 0x400, scoped, tag = 'input window, operand 3, single buffered']
    #allocation5 [shape = 's32[1]{0}', space=sflag, size = 0x4, scoped, tag = 'scoped memory for tpu_custom_call.1']
    %11 = vsyncpa [#allocation3], 0
    %12 = vsyncpa [#allocation5], 0
    loop: start=0, step=1, limit=4
    $region2: #{tpu_custom_call.1} parent=1 // loop_pre_header
      _
    $region3: #{tpu_custom_call.1} parent=1 // loop_header
      %s14 = sphi 0, %s18
      %p15 = scmp.ge.s32.totalorder %s14, 4
      %s21 = sphi 0, %s33
      %s22 = sphi 0, %s29
      %s23 = sphi 0, %s21
      %s24 = sphi 0, %s22
      %s25 = sphi 0, %s23
      %s26 = sphi 0, %s24
      %s38 = sphi 0, %s40
      %s41 = sphi 0, %s38
      %s42 = sphi 0, %s41
      %s58 = sphi 0, %s42
      %s62 = sphi 0, %s62
      %s64 = sphi 0, %s62
      %s65 = sphi 0, %s64
      %s79 = sphi 0, %s65
      %s83 = sphi 0, %s83
      %s85 = sphi 0, %s83
      %s86 = sphi 0, %s85
      %s100 = sphi 0, %s86
      %s104 = sphi 0, %s104
      %s106 = sphi 0, %s104
      %s107 = sphi 0, %s106
      %s121 = sphi 0, %s107
      %s127 = sphi 0, %s129
      %s130 = sphi 0, %s127
      %s131 = sphi 0, %s130
      %s147 = sphi 0, %s131
      %s151 = sphi 0, %s151
      %s153 = sphi 0, %s151
      %s154 = sphi 0, %s153
      %s168 = sphi 0, %s154
      %s176 = sphi 0, %s178
      %s179 = sphi 0, %s176
      %s180 = sphi 0, %s179
      %s196 = sphi 0, %s180
    $region4: #{tpu_custom_call.1} parent=1 // loop_header_branch
      %17 = sbr.rel (%p15) target = $region8
    $region5: #{tpu_custom_call.1} parent=1 // loop_body
      %s19 = ssub.s32 %s14, 1
      %s20 = ssub.s32 %s14, 2
      %s27 = sadd.s32 1, %s22
      %p28 = scmp.ge.s32.totalorder %s27, 1
      %s29 = scalar_select %p28, 0, %s27
      %s30 = sadd.s32 1, %s21
      %s31 = scalar_select %p28, %s30, %s21
      %p32 = scmp.ge.s32.totalorder %s31, 2
      %s33 = scalar_select %p32, 0, %s31
      %s34 = ssub.s32 %s21, %s33
      %s35 = ssub.s32 %s22, %s29
      %s36 = sor.u32 %s34, %s35
      %p37 = scmp.eq.s32.totalorder %s36, 0
      %s39 = sadd.s32 %s38, 1
      %s40 = scalar_select %p37, %s38, %s39
      %p43 = pneg %p37
      %p44 = scmp.eq.s32.totalorder %s14, 1
      %p45 = por %p43, %p44
      %p46 = scmp.ne.s32.totalorder %s38, %s41
      %p47 = scmp.eq.s32.totalorder %s14, 0
      %p48 = por %p46, %p47
      %p49 = scmp.ne.s32.totalorder %s38, %s41
      %p50 = scmp.eq.s32.totalorder %s19, 1
      %p51 = por %p49, %p50
      %p52 = scmp.ne.s32.totalorder %s41, %s42
      %p53 = scmp.eq.s32.totalorder %s19, 0
      %p54 = por %p52, %p53
      %p55 = scmp.ne.s32.totalorder %s41, %s42
      %p56 = scmp.eq.s32.totalorder %s20, 1
      %p57 = por %p55, %p56
      %p59 = scmp.ne.s32.totalorder %s42, %s58
      %p60 = scmp.eq.s32.totalorder %s20, 0
      %p61 = por %p59, %p60
      %s63 = sadd.s32 %s62, 1
      %p66 = scmp.eq.s32.totalorder %s14, 1
      %p67 = scmp.ne.s32.totalorder %s62, %s64
      %p68 = scmp.eq.s32.totalorder %s14, 0
      %p69 = por %p67, %p68
      %p70 = scmp.ne.s32.totalorder %s62, %s64
      %p71 = scmp.eq.s32.totalorder %s19, 1
      %p72 = por %p70, %p71
      %p73 = scmp.ne.s32.totalorder %s64, %s65
      %p74 = scmp.eq.s32.totalorder %s19, 0
      %p75 = por %p73, %p74
      %p76 = scmp.ne.s32.totalorder %s64, %s65
      %p77 = scmp.eq.s32.totalorder %s20, 1
      %p78 = por %p76, %p77
      %p80 = scmp.ne.s32.totalorder %s65, %s79
      %p81 = scmp.eq.s32.totalorder %s20, 0
      %p82 = por %p80, %p81
      %s84 = sadd.s32 %s83, 1
      %p87 = scmp.eq.s32.totalorder %s14, 1
      %p88 = scmp.ne.s32.totalorder %s83, %s85
      %p89 = scmp.eq.s32.totalorder %s14, 0
      %p90 = por %p88, %p89
      %p91 = scmp.ne.s32.totalorder %s83, %s85
      %p92 = scmp.eq.s32.totalorder %s19, 1
      %p93 = por %p91, %p92
      %p94 = scmp.ne.s32.totalorder %s85, %s86
      %p95 = scmp.eq.s32.totalorder %s19, 0
      %p96 = por %p94, %p95
      %p97 = scmp.ne.s32.totalorder %s85, %s86
      %p98 = scmp.eq.s32.totalorder %s20, 1
      %p99 = por %p97, %p98
      %p101 = scmp.ne.s32.totalorder %s86, %s100
      %p102 = scmp.eq.s32.totalorder %s20, 0
      %p103 = por %p101, %p102
      %s105 = sadd.s32 %s104, 1
      %p108 = scmp.eq.s32.totalorder %s14, 1
      %p109 = scmp.ne.s32.totalorder %s104, %s106
      %p110 = scmp.eq.s32.totalorder %s14, 0
      %p111 = por %p109, %p110
      %p112 = scmp.ne.s32.totalorder %s104, %s106
      %p113 = scmp.eq.s32.totalorder %s19, 1
      %p114 = por %p112, %p113
      %p115 = scmp.ne.s32.totalorder %s106, %s107
      %p116 = scmp.eq.s32.totalorder %s19, 0
      %p117 = por %p115, %p116
      %p118 = scmp.ne.s32.totalorder %s106, %s107
      %p119 = scmp.eq.s32.totalorder %s20, 1
      %p120 = por %p118, %p119
      %p122 = scmp.ne.s32.totalorder %s107, %s121
      %p123 = scmp.eq.s32.totalorder %s20, 0
      %p124 = por %p122, %p123
      %s125 = ssub.s32 %s22, %s29
      %p126 = scmp.eq.s32.totalorder %s125, 0
      %s128 = sadd.s32 %s127, 1
      %s129 = scalar_select %p126, %s127, %s128
      %p132 = pneg %p126
      %p133 = scmp.eq.s32.totalorder %s14, 1
      %p134 = por %p132, %p133
      %p135 = scmp.ne.s32.totalorder %s127, %s130
      %p136 = scmp.eq.s32.totalorder %s14, 0
      %p137 = por %p135, %p136
      %p138 = scmp.ne.s32.totalorder %s127, %s130
      %p139 = scmp.eq.s32.totalorder %s19, 1
      %p140 = por %p138, %p139
      %p141 = scmp.ne.s32.totalorder %s130, %s131
      %p142 = scmp.eq.s32.totalorder %s19, 0
      %p143 = por %p141, %p142
      %p144 = scmp.ne.s32.totalorder %s130, %s131
      %p145 = scmp.eq.s32.totalorder %s20, 1
      %p146 = por %p144, %p145
      %p148 = scmp.ne.s32.totalorder %s131, %s147
      %p149 = scmp.eq.s32.totalorder %s20, 0
      %p150 = por %p148, %p149
      %s152 = sadd.s32 %s151, 1
      %p155 = scmp.eq.s32.totalorder %s14, 1
      %p156 = scmp.ne.s32.totalorder %s151, %s153
      %p157 = scmp.eq.s32.totalorder %s14, 0
      %p158 = por %p156, %p157
      %p159 = scmp.ne.s32.totalorder %s151, %s153
      %p160 = scmp.eq.s32.totalorder %s19, 1
      %p161 = por %p159, %p160
      %p162 = scmp.ne.s32.totalorder %s153, %s154
      %p163 = scmp.eq.s32.totalorder %s19, 0
      %p164 = por %p162, %p163
      %p165 = scmp.ne.s32.totalorder %s153, %s154
      %p166 = scmp.eq.s32.totalorder %s20, 1
      %p167 = por %p165, %p166
      %p169 = scmp.ne.s32.totalorder %s154, %s168
      %p170 = scmp.eq.s32.totalorder %s20, 0
      %p171 = por %p169, %p170
      %s172 = ssub.s32 %s21, %s33
      %s173 = ssub.s32 %s22, %s29
      %s174 = sor.u32 %s172, %s173
      %p175 = scmp.eq.s32.totalorder %s174, 0
      %s177 = sadd.s32 %s176, 1
      %s178 = scalar_select %p175, %s176, %s177
      %p181 = pneg %p175
      %p182 = scmp.eq.s32.totalorder %s14, 1
      %p183 = por %p181, %p182
      %p184 = scmp.ne.s32.totalorder %s176, %s179
      %p185 = scmp.eq.s32.totalorder %s14, 0
      %p186 = por %p184, %p185
      %p187 = scmp.ne.s32.totalorder %s176, %s179
      %p188 = scmp.eq.s32.totalorder %s19, 1
      %p189 = por %p187, %p188
      %p190 = scmp.ne.s32.totalorder %s179, %s180
      %p191 = scmp.eq.s32.totalorder %s19, 0
      %p192 = por %p190, %p191
      %p193 = scmp.ne.s32.totalorder %s179, %s180
      %p194 = scmp.eq.s32.totalorder %s20, 1
      %p195 = por %p193, %p194
      %p197 = scmp.ne.s32.totalorder %s180, %s196
      %p198 = scmp.eq.s32.totalorder %s20, 0
      %p199 = por %p197, %p198
      %p200 = scmp.le.s32.totalorder 1, %s14
      %p201 = scmp.lt.s32.totalorder %s14, 3
      %p202 = pnand %p200, %p201
      %p203 = pneg %p202
      // Predicated region
      $region9: #{tpu_custom_call.1} parent=5 // pred_check
        _
      $region10: #{tpu_custom_call.1} parent=5 // pred_check_branch
        %205 = sbr.rel (%p202) target = $region12
      $region11: #{tpu_custom_call.1} parent=5 // pred_region
        %s206 = ssub.s32 %s14, 1
        // Predicated region
        $region13: #{tpu_custom_call.1} parent=11 // pred_check
          %p207 = pneg %p75
        $region14: #{tpu_custom_call.1} parent=11 // pred_check_branch
          %209 = sbr.rel (%p207) target = $region16
        $region15: #{tpu_custom_call.1} parent=11 // pred_region
          _
        $region16: #{tpu_custom_call.1} parent=11 // pred_fallthru
          _
        // Predicated region
        $region17: #{tpu_custom_call.1} parent=11 // pred_check
          %p210 = pneg %p96
        $region18: #{tpu_custom_call.1} parent=11 // pred_check_branch
          %212 = sbr.rel (%p210) target = $region20
        $region19: #{tpu_custom_call.1} parent=11 // pred_region
          %s214 = ssub.s32 16, 16
          %215 = vsyncadd [#allocation3], %s214
          %s217 = sshll.u32 [#allocation2], 4
          %s218 = int_to_ptr.vmem [resolvable:$true] %s217
          %220 = dma.hbm_to_vmem [thread:$0]  %s2, 16, %s218, [#allocation3]
        $region20: #{tpu_custom_call.1} parent=11 // pred_fallthru
          _
        // Predicated region
        $region21: #{tpu_custom_call.1} parent=11 // pred_check
          %p221 = pneg %p117
        $region22: #{tpu_custom_call.1} parent=11 // pred_check_branch
          %223 = sbr.rel (%p221) target = $region24
        $region23: #{tpu_custom_call.1} parent=11 // pred_region
          %s225 = ssub.s32 16, 16
          %226 = vsyncadd [#allocation5], %s225
          %s228 = sshll.u32 [#allocation4], 4
          %s229 = int_to_ptr.vmem [resolvable:$true] %s228
          %231 = dma.hbm_to_vmem [thread:$0]  %s3, 16, %s229, [#allocation5]
        $region24: #{tpu_custom_call.1} parent=11 // pred_fallthru
          _
        // Predicated region
        $region25: #{tpu_custom_call.1} parent=11 // pred_check
          %p232 = pneg %p143
        $region26: #{tpu_custom_call.1} parent=11 // pred_check_branch
          %234 = sbr.rel (%p232) target = $region28
        $region27: #{tpu_custom_call.1} parent=11 // pred_region
          %s235 = smul.u32 2, %s24
          %p236 = scmp.lt.s32.totalorder %s235, 1
          %s237 = scalar_select %p236, %s235, 1
          %s238 = smul.addr %s237, 8
          %s239 = scalar_lea.vmem %s4, %s238
          %s240 = smul.u32 2, %s24
        $region28: #{tpu_custom_call.1} parent=11 // pred_fallthru
          _
        // Predicated region
        $region29: #{tpu_custom_call.1} parent=11 // pred_check
          %p241 = pneg %p164
        $region30: #{tpu_custom_call.1} parent=11 // pred_check_branch
          %243 = sbr.rel (%p241) target = $region32
        $region31: #{tpu_custom_call.1} parent=11 // pred_region
          _
        $region32: #{tpu_custom_call.1} parent=11 // pred_fallthru
          _
      $region12: #{tpu_custom_call.1} parent=5 // pred_fallthru
        _
      %p244 = scmp.lt.s32.totalorder %s14, 2
      // Predicated region
      $region33: #{tpu_custom_call.1} parent=5 // pred_check
        %p245 = pneg %p244
      $region34: #{tpu_custom_call.1} parent=5 // pred_check_branch
        %247 = sbr.rel (%p245) target = $region36
      $region35: #{tpu_custom_call.1} parent=5 // pred_region
        // Predicated region
        $region37: #{tpu_custom_call.1} parent=35 // pred_check
          %p248 = pneg %p48
        $region38: #{tpu_custom_call.1} parent=35 // pred_check_branch
          %250 = sbr.rel (%p248) target = $region40
        $region39: #{tpu_custom_call.1} parent=35 // pred_region
          %s251 = smul.u32 2, %s22
          %p252 = scmp.lt.s32.totalorder %s21, 1
          %s253 = scalar_select %p252, %s21, 1
          %p254 = scmp.lt.s32.totalorder %s251, 1
          %s255 = scalar_select %p254, %s251, 1
          %s256 = smul.addr %s253, 2
          %s257 = sadd.s32 %s255, %s256
          %s258 = smul.addr %s257, 4
          %s259 = scalar_lea.vmem %s0, %s258
          %s260 = smul.u32 2, %s22
        $region40: #{tpu_custom_call.1} parent=35 // pred_fallthru
          _
      $region36: #{tpu_custom_call.1} parent=5 // pred_fallthru
        _
      %p261 = scmp.le.s32.totalorder 1, %s14
      %p262 = scmp.lt.s32.totalorder %s14, 3
      %p263 = pnand %p261, %p262
      %p264 = pneg %p263
      // Predicated region
      $region41: #{tpu_custom_call.1} parent=5 // pred_check
        _
      $region42: #{tpu_custom_call.1} parent=5 // pred_check_branch
        %266 = sbr.rel (%p263) target = $region44
      $region43: #{tpu_custom_call.1} parent=5 // pred_region
        %s267 = ssub.s32 %s14, 1
        // Predicated region
        $region45: #{tpu_custom_call.1} parent=43 // pred_check
          %p268 = pneg %p96
        $region46: #{tpu_custom_call.1} parent=43 // pred_check_branch
          %270 = sbr.rel (%p268) target = $region48
        $region47: #{tpu_custom_call.1} parent=43 // pred_region
          %271 = dma.done [#allocation3], 16
        $region48: #{tpu_custom_call.1} parent=43 // pred_fallthru
          _
        // Predicated region
        $region49: #{tpu_custom_call.1} parent=43 // pred_check
          %p272 = pneg %p117
        $region50: #{tpu_custom_call.1} parent=43 // pred_check_branch
          %274 = sbr.rel (%p272) target = $region52
        $region51: #{tpu_custom_call.1} parent=43 // pred_region
          %275 = dma.done [#allocation5], 16
        $region52: #{tpu_custom_call.1} parent=43 // pred_fallthru
          _
        %s276 = smul.u32 2, %s24
        %p277 = scmp.lt.s32.totalorder %s23, 1
        %s278 = scalar_select %p277, %s23, 1
        %p279 = scmp.lt.s32.totalorder %s276, 1
        %s280 = scalar_select %p279, %s276, 1
        %s281 = smul.addr %s278, 2
        %s282 = sadd.s32 %s280, %s281
        %s283 = smul.addr %s282, 4
        %s284 = scalar_lea.vmem %s0, %s283
        %p285 = pneg %p54
        %p286 = pneg %p51
        %p287 = pneg %p75
        %p288 = pneg %p72
        %p289 = pneg %p96
        %p290 = pneg %p93
        %p291 = pneg %p117
        %p292 = pneg %p114
        %s293 = smul.u32 2, %s24
        %p294 = scmp.lt.s32.totalorder %s293, 1
        %s295 = scalar_select %p294, %s293, 1
        %s296 = smul.addr %s295, 8
        %s297 = scalar_lea.vmem %s4, %s296
        %p298 = pneg %p143
        %p299 = pneg %p140
        %p300 = pneg %p164
        %p301 = pneg %p161
        %p302 = pneg %p192
        %p303 = pneg %p189
        %s304 = smul.u32 2, %s24
        %p305 = scmp.lt.s32.totalorder %s23, 1
        %s306 = scalar_select %p305, %s23, 1
        %p307 = scmp.lt.s32.totalorder %s304, 1
        %s308 = scalar_select %p307, %s304, 1
        %s309 = smul.addr %s306, 2
        %s310 = sadd.s32 %s308, %s309
        %s311 = smul.addr %s310, 8
        %s312 = scalar_lea.vmem %s6, %s311
        %s313 = smul.u32 2, %s24
        %p314 = scmp.lt.s32.totalorder %s23, 1
        %s315 = scalar_select %p314, %s23, 1
        %p316 = scmp.lt.s32.totalorder %s313, 1
        %s317 = scalar_select %p316, %s313, 1
        %s318 = smul.addr %s315, 2
        %s319 = sadd.s32 %s317, %s318
        %s320 = smul.addr %s319, 4
        %s321 = scalar_lea.vmem %s0, %s320
        %s322 = smul.u32 2, %s24
        %s323 = smul.u32 2, %s24
        %p324 = scmp.lt.s32.totalorder %s323, 1
        %s325 = scalar_select %p324, %s323, 1
        %s326 = smul.addr %s325, 8
        %s327 = scalar_lea.vmem %s4, %s326
        %s328 = smul.u32 2, %s24
        %s329 = smul.u32 2, %s24
        %p330 = scmp.lt.s32.totalorder %s23, 1
        %s331 = scalar_select %p330, %s23, 1
        %p332 = scmp.lt.s32.totalorder %s329, 1
        %s333 = scalar_select %p332, %s329, 1
        %s334 = smul.addr %s331, 2
        %s335 = sadd.s32 %s333, %s334
        %s336 = smul.addr %s335, 8
        %s337 = scalar_lea.vmem %s6, %s336
        %s338 = smul.u32 2, %s24
        %v340 = vld [vmem:[%s321] sm:$0xf]
        %v341 = vld [vmem:[%s321 + $0x4] sm:$0x1]
        %v342 = vld [vmem:[%s1] sm:$0xf]
        %v343 = vld [vmem:[%s1 + $0x4] sm:$0xf]
        %v344 = vld [vmem:[%s1 + $0x8] sm:$0xf]
        %v345 = vld [vmem:[%s1 + $0xc] sm:$0xf]
        %v346 = vld [vmem:[%s1 + $0x10] sm:$0xf]
        %v347 = vld [vmem:[%s1 + $0x14] sm:$0xf]
        %v350 = vunpack.c.l.b16 %v340
        %v351 = vunpack.c.l.b16 %v341
        %v352 = vpack.c.b16 %v351, %v350
        %v359 = vunpack.c.l.b16 %v342
        %v360 = vunpack.c.l.b16 %v343
        %v361 = vunpack.c.l.b16 %v344
        %v362 = vunpack.c.l.b16 %v345
        %v363 = vunpack.c.l.b16 %v346
        %v364 = vunpack.c.l.b16 %v347
        %v365 = vpack.c.b16 %v360, %v359
        %v366 = vpack.c.b16 %v362, %v361
        %v367 = vpack.c.b16 %v364, %v363
        %vm371 = vcmask 392192
        %v373 = vsel %vm371, %v352, 0
        %375 = vmatprep.subr.bf16.mxu0 0
        %376 = vmatpush1.bf16.msra.mxu0 %v365
        %377 = vmatprep.subr.bf16.mxu0 0
        %378 = vmatpush1.bf16.msra.mxu0 %v366
        %379 = vmatprep.subr.bf16.mxu0 0
        %380 = vmatpush1.bf16.msra.mxu0 %v367
        %381 = vmatprep.subr.bf16.mxu0 0
        %382 = vmatpush1.bf16.msra.mxu0 0
        %383 = vmatprep.subr.bf16.mxu0 0
        %384 = vmatpush1.bf16.msra.mxu0 0
        %385 = vmatprep.subr.bf16.mxu0 0
        %386 = vmatpush1.bf16.msra.mxu0 0
        %387 = vmatprep.subr.bf16.mxu0 0
        %388 = vmatpush1.bf16.msra.mxu0 0
        %389 = vmatprep.subr.bf16.mxu0 0
        %390 = vmatpush1.bf16.msra.mxu0 0
        %391 = vmatprep.subr.bf16.mxu0 0
        %392 = vmatpush1.bf16.msra.mxu0 0
        %393 = vmatprep.subr.bf16.mxu0 0
        %394 = vmatpush1.bf16.msra.mxu0 0
        %395 = vmatprep.subr.bf16.mxu0 0
        %396 = vmatpush1.bf16.msra.mxu0 0
        %397 = vmatprep.subr.bf16.mxu0 0
        %398 = vmatpush1.bf16.msra.mxu0 0
        %399 = vmatprep.subr.bf16.mxu0 0
        %400 = vmatpush1.bf16.msra.mxu0 0
        %401 = vmatprep.subr.bf16.mxu0 0
        %402 = vmatpush1.bf16.msra.mxu0 0
        %403 = vmatprep.subr.bf16.mxu0 0
        %404 = vmatpush1.bf16.msra.mxu0 0
        %405 = vmatprep.subr.bf16.mxu0 0
        %406 = vmatpush1.bf16.msra.mxu0 0
        %407 = vmatprep.mubr.bf16.mxu0 0
        %408 = vmatmul.mubr.bf16.gmra.mrb[0].mxu0 %v373
        %v409 = vpop.f32.mrb[0].mxu0
        %v410 = vadd.f32 0.0, %v409
        %v411 = vpop.f32.mrb[0].mxu0
        %v412 = vpop.f32.mrb[0].mxu0
        %v413 = vadd.f32 0.0, %v412
        %v414 = vpop.f32.mrb[0].mxu0
        %415 = vdwg.mxu0
        %416 = vadd.xlane.f32.xlu0 %v410
        %v417 = vpop.xlane.xlu0 %416
        %vm418 = vcmask 1040384
        %v419 = vsel %vm418, %v413, 0.0
        %420 = vadd.xlane.f32.xlu0 %v419
        %v421 = vpop.xlane.xlu0 %420
        %v422 = vmul.f32 %v417, 0.03125
        %v423 = vmul.f32 %v421, 0.03125
        %v424 = vmul.f32 %v410, %v410
        %v425 = vmul.f32 %v413, %v413
        %426 = vadd.xlane.f32.xlu0 %v424
        %v427 = vpop.xlane.xlu0 %426
        %v428 = vsel %vm418, %v425, 0.0
        %429 = vadd.xlane.f32.xlu0 %v428
        %v430 = vpop.xlane.xlu0 %429
        %v431 = vmul.f32 %v427, 0.03125
        %v432 = vmul.f32 %v430, 0.03125
        %v433 = vmul.f32 %v422, %v422
        %v434 = vmul.f32 %v423, %v423
        %v435 = vsub.f32 %v431, %v433
        %v436 = vsub.f32 %v432, %v434
        %v437 = vmax.f32 %v435, 0.0
        %v438 = vmax.f32 %v436, 0.0
        %v439 = vsub.f32 %v410, %v422
        %v440 = vsub.f32 %v413, %v423
        %v441 = vadd.f32 %v437, 1e-05
        %v442 = vadd.f32 %v438, 1e-05
        %v443 = vrsqrt.pop %v441
        %v444 = vrsqrt.pop %v442
        %v445 = vmul.f32 %v439, %v443
        %v446 = vmul.f32 %v440, %v444
        %v447 = vld [vmem:[#allocation2] sm:$0x1]
        %v449 = vlaneseq
        %v450 = vshrl.u32 %v449, 7
        %v451 = vsub.s32 0, %v450
        %v452 = vrot.slane %v447, %v451
        %v454 = vmul.f32 %v445, %v452
        %v455 = vmul.f32 %v446, %v452
        %v456 = vld [vmem:[#allocation4] sm:$0x1]
        %v458 = vlaneseq
        %v459 = vshrl.u32 %v458, 7
        %v460 = vsub.s32 0, %v459
        %v461 = vrot.slane %v456, %v460
        %v463 = vadd.f32 %v454, %v461
        %v464 = vadd.f32 %v455, %v461
        %v465 = vld [vmem:[%s327] sm:$0xff]
        %v466 = vld [vmem:[%s327 + $0x8] sm:$0x1]
        %v467 = vadd.f32 %v463, %v465
        %v468 = vadd.f32 %v464, %v466
        %469 = vst [vmem:[%s337] sm:$0xff] %v467
        %470 = vst [vmem:[%s337 + $0x8] sm:$0x1] %v468
        %p471 = scmp.eq.s32.totalorder %s24, 0
        // Predicated region
        $region53: #{tpu_custom_call.1} parent=43 // pred_check
          %p472 = pneg %p471
        $region54: #{tpu_custom_call.1} parent=43 // pred_check_branch
          %474 = sbr.rel (%p472) target = $region56
        $region55: #{tpu_custom_call.1} parent=43 // pred_region
          %v475 = vld [vmem:[%s5] sm:$0x1]
          %476 = vst [vmem:[%s337] sm:$0x1] %v475
        $region56: #{tpu_custom_call.1} parent=43 // pred_fallthru
          _
        %s477 = smul.u32 2, %s24
        %p478 = scmp.lt.s32.totalorder %s23, 1
        %s479 = scalar_select %p478, %s23, 1
        %p480 = scmp.lt.s32.totalorder %s477, 1
        %s481 = scalar_select %p480, %s477, 1
        %s482 = smul.addr %s479, 2
        %s483 = sadd.s32 %s481, %s482
        %s484 = smul.addr %s483, 8
        %s485 = scalar_lea.vmem %s6, %s484
        // Predicated region
        $region57: #{tpu_custom_call.1} parent=43 // pred_check
          %p486 = pneg %p189
        $region58: #{tpu_custom_call.1} parent=43 // pred_check_branch
          %488 = sbr.rel (%p486) target = $region60
        $region59: #{tpu_custom_call.1} parent=43 // pred_region
          %s489 = smul.u32 2, %s24
        $region60: #{tpu_custom_call.1} parent=43 // pred_fallthru
          _
      $region44: #{tpu_custom_call.1} parent=5 // pred_fallthru
        _
      %p490 = scmp.le.s32.totalorder 2, %s14
      // Predicated region
      $region61: #{tpu_custom_call.1} parent=5 // pred_check
        %p491 = pneg %p490
      $region62: #{tpu_custom_call.1} parent=5 // pred_check_branch
        %493 = sbr.rel (%p491) target = $region64
      $region63: #{tpu_custom_call.1} parent=5 // pred_region
        %s494 = ssub.s32 %s14, 2
        // Predicated region
        $region65: #{tpu_custom_call.1} parent=63 // pred_check
          %p495 = pneg %p195
        $region66: #{tpu_custom_call.1} parent=63 // pred_check_branch
          %497 = sbr.rel (%p495) target = $region68
        $region67: #{tpu_custom_call.1} parent=63 // pred_region
          %s498 = smul.u32 2, %s26
          %p499 = scmp.lt.s32.totalorder %s25, 1
          %s500 = scalar_select %p499, %s25, 1
          %p501 = scmp.lt.s32.totalorder %s498, 1
          %s502 = scalar_select %p501, %s498, 1
          %s503 = smul.addr %s500, 2
          %s504 = sadd.s32 %s502, %s503
          %s505 = smul.addr %s504, 8
          %s506 = scalar_lea.vmem %s6, %s505
        $region68: #{tpu_custom_call.1} parent=63 // pred_fallthru
          _
      $region64: #{tpu_custom_call.1} parent=5 // pred_fallthru
        _
    $region6: #{tpu_custom_call.1} parent=1 // loop_footer
      %s18 = sadd.s32 1, %s14
    $region7: #{tpu_custom_call.1} parent=1 // loop_footer_branch
      %13 = sbr.rel target = $region3
    $region8: #{tpu_custom_call.1} parent=1 // loop_exit
      _
    %507 = vsyncpa [#allocation3], 1
    %s508 = scalar_lea.sflag [#allocation3], 1
    %509 = vsyncpa %s508, 1
    %510 = vsyncpa [#allocation5], 1

</llo_original>
